<compile_context>
chip_gen: v6e
topology: v6e:2x2x1
jax: 0.10.0
libtpu: 0.0.40
codegen_flags: <defaults>
</compile_context>

<pallas_src>
import jax
import jax.numpy as jnp
from jax.experimental import pallas as pl
from jax.experimental.pallas import tpu as pltpu


def _pg_kernel(x_ref, w1_ref, b1_ref, w2_ref, b2_ref, out_ref):
    # fc1: Linear + Tanh
    x = x_ref[...]
    h = jnp.tanh(
        jnp.dot(x, w1_ref[...], preferred_element_type=jnp.float32) + b1_ref[...]
    )
    # fc2: Linear + Softmax over the (narrow) action axis.
    logits = jnp.dot(h, w2_ref[...], preferred_element_type=jnp.float32) + b2_ref[...]
    m = jnp.max(logits, axis=-1, keepdims=True)
    e = jnp.exp(logits - m)
    denom = jnp.sum(e, axis=-1, keepdims=True)
    # EUP approx reciprocal (free slot) + one Newton-Raphson refinement for ~f32 accuracy.
    r = pl.reciprocal(denom, approx=True)
    r = r * (2.0 - denom * r)
    out_ref[...] = (e * r).astype(out_ref.dtype)


def _choose_batch_tile(B, tb_max):
    """Pick TB: multiple of 8 sublanes, >=2 grid steps when B permits (v7x megacore),
    capped at tb_max, and no larger than B rounded up to 8."""
    if B <= 8:
        return B  # block sublane dim equals full array dim -> legal without padding
    n_steps = max(2, pl.cdiv(B, tb_max))
    tb = ((pl.cdiv(B, n_steps) + 7) // 8) * 8
    tb = min(tb, ((B + 7) // 8) * 8, tb_max)
    return max(8, tb)


def policy_gradient_net(x, w1, b1, w2, b2, *, tb_max=4096):
    """Forward of PolicyGradientNet: softmax(tanh(x @ w1 + b1) @ w2 + b2, axis=-1)."""
    B, F = x.shape
    H = w1.shape[1]
    A = w2.shape[1]

    TB = _choose_batch_tile(B, tb_max)
    grid = (pl.cdiv(B, TB),)

    out = pl.pallas_call(
        _pg_kernel,
        out_shape=jax.ShapeDtypeStruct((B, A), jnp.float32),
        grid_spec=pltpu.PrefetchScalarGridSpec(
            num_scalar_prefetch=0,
            grid=grid,
            in_specs=[
                pl.BlockSpec((TB, F), lambda i: (i, 0)),  # streamed per grid step
                pl.BlockSpec((F, H), lambda i: (0, 0)),   # VMEM-resident weights
                pl.BlockSpec((1, H), lambda i: (0, 0)),
                pl.BlockSpec((H, A), lambda i: (0, 0)),
                pl.BlockSpec((1, A), lambda i: (0, 0)),
            ],
            out_specs=pl.BlockSpec((TB, A), lambda i: (i, 0)),  # narrow (TB, A) store
        ),
        compiler_params=pltpu.CompilerParams(
            dimension_semantics=("parallel",),
        ),
    )(x, w1, b1, w2, b2)
    return out


def init_params(key, n_features, n_hiddens, n_actions):
    # Deterministic init mimicking PyTorch Linear default (uniform +/- 1/sqrt(fan_in)).
    k1, k2, k3, k4 = jax.random.split(key, 4)
    bound1 = 1.0 / jnp.sqrt(n_features)
    bound2 = 1.0 / jnp.sqrt(n_hiddens)
    w1 = jax.random.uniform(k1, (n_features, n_hiddens), jnp.float32, -bound1, bound1)
    b1 = jax.random.uniform(k2, (1, n_hiddens), jnp.float32, -bound1, bound1)
    w2 = jax.random.uniform(k3, (n_hiddens, n_actions), jnp.float32, -bound2, bound2)
    b2 = jax.random.uniform(k4, (1, n_actions), jnp.float32, -bound2, bound2)
    return w1, b1, w2, b2


if __name__ == "__main__":
    key = jax.random.PRNGKey(0)
    kx, kp = jax.random.split(key)

    batch = 32
    n_features = 16
    n_hiddens = 32
    n_actions = 4

    x = jax.random.normal(kx, (batch, n_features), jnp.float32)
    w1, b1, w2, b2 = init_params(kp, n_features, n_hiddens, n_actions)

    # Default tb_max=4096 -> at batch=32 this still yields a 2-step grid (TB=16),
    # exercising the multi-step / megacore-parallel path.
    out = policy_gradient_net(x, w1, b1, w2, b2)
    out = jax.block_until_ready(out)

    # Reference check (pure JAX) for sanity.
    h_ref = jnp.tanh(x @ w1 + b1)
    logits_ref = h_ref @ w2 + b2
    ref = jax.nn.softmax(logits_ref, axis=-1)
    assert out.shape == (batch, n_actions)
    assert jnp.allclose(out, ref, atol=1e-5, rtol=1e-5)
    assert jnp.allclose(jnp.sum(out, axis=-1), 1.0, atol=1e-5)

    print("KERNEL_OK")
</pallas_src>

<mosaic_0001>
module attributes {stable_mosaic.version = 11 : i64} {
  func.func @_pg_kernel(%arg0: i32, %arg1: memref<16x16xf32, #tpu.memory_space<vmem>>, %arg2: memref<16x32xf32, #tpu.memory_space<vmem>>, %arg3: memref<1x32xf32, #tpu.memory_space<vmem>>, %arg4: memref<32x4xf32, #tpu.memory_space<vmem>>, %arg5: memref<1x4xf32, #tpu.memory_space<vmem>>, %arg6: memref<16x4xf32, #tpu.memory_space<vmem>>) attributes {dimension_semantics = [#tpu.dimension_semantics<parallel>], iteration_bounds = array<i64: 2>, scalar_prefetch = 0 : i64, scratch_operands = 0 : i64, tpu.core_type = #tpu.core_type<tc>, window_params = [{transform_indices = @transform_0, window_bounds = array<i64: 16, 16>}, {pipeline_mode = #tpu.pipeline_mode<synchronous>, transform_indices = @transform_1, window_bounds = array<i64: 16, 32>}, {pipeline_mode = #tpu.pipeline_mode<synchronous>, transform_indices = @transform_2, window_bounds = array<i64: 1, 32>}, {pipeline_mode = #tpu.pipeline_mode<synchronous>, transform_indices = @transform_3, window_bounds = array<i64: 32, 4>}, {pipeline_mode = #tpu.pipeline_mode<synchronous>, transform_indices = @transform_4, window_bounds = array<i64: 1, 4>}, {transform_indices = @transform_5, window_bounds = array<i64: 16, 4>}]} {
    %c0 = arith.constant 0 : index
    %c0_0 = arith.constant 0 : index
    %0 = vector.load %arg1[%c0, %c0_0] : memref<16x16xf32, #tpu.memory_space<vmem>>, vector<16x16xf32>
    %c0_1 = arith.constant 0 : index
    %c0_2 = arith.constant 0 : index
    %1 = vector.load %arg2[%c0_1, %c0_2] : memref<16x32xf32, #tpu.memory_space<vmem>>, vector<16x32xf32>
    %cst = arith.constant dense<0.000000e+00> : vector<16x32xf32>
    %2 = tpu.matmul %0, %1, %cst {dimension_numbers = #tpu.dot_dimension_numbers<[1], [0], [0], [1], [0, 0, 1, 1], [], []>} : vector<16x16xf32>, vector<16x32xf32>, vector<16x32xf32> -> vector<16x32xf32>
    %c0_3 = arith.constant 0 : index
    %c0_4 = arith.constant 0 : index
    %3 = vector.load %arg3[%c0_3, %c0_4] : memref<1x32xf32, #tpu.memory_space<vmem>>, vector<1x32xf32>
    %4 = vector.broadcast %3 : vector<1x32xf32> to vector<16x32xf32>
    %5 = arith.addf %2, %4 : vector<16x32xf32>
    %6 = math.tanh %5 : vector<16x32xf32>
    %c0_5 = arith.constant 0 : index
    %c0_6 = arith.constant 0 : index
    %7 = vector.load %arg4[%c0_5, %c0_6] : memref<32x4xf32, #tpu.memory_space<vmem>>, vector<32x4xf32>
    %cst_7 = arith.constant dense<0.000000e+00> : vector<16x4xf32>
    %8 = tpu.matmul %6, %7, %cst_7 {dimension_numbers = #tpu.dot_dimension_numbers<[1], [0], [0], [1], [0, 0, 1, 1], [], []>} : vector<16x32xf32>, vector<32x4xf32>, vector<16x4xf32> -> vector<16x4xf32>
    %c0_8 = arith.constant 0 : index
    %c0_9 = arith.constant 0 : index
    %9 = vector.load %arg5[%c0_8, %c0_9] : memref<1x4xf32, #tpu.memory_space<vmem>>, vector<1x4xf32>
    %10 = vector.broadcast %9 : vector<1x4xf32> to vector<16x4xf32>
    %11 = arith.addf %8, %10 : vector<16x4xf32>
    %cst_10 = arith.constant dense<0xFF800000> : vector<16xf32>
    %12 = vector.multi_reduction <maximumf>, %11, %cst_10 [1] : vector<16x4xf32> to vector<16xf32>
    %13 = vector.shape_cast %12 : vector<16xf32> to vector<16x1xf32>
    %14 = vector.broadcast %13 : vector<16x1xf32> to vector<16x4xf32>
    %15 = arith.subf %11, %14 : vector<16x4xf32>
    %16 = math.exp %15 : vector<16x4xf32>
    %cst_11 = arith.constant dense<0.000000e+00> : vector<16xf32>
    %17 = vector.multi_reduction <add>, %16, %cst_11 [1] : vector<16x4xf32> to vector<16xf32>
    %18 = vector.shape_cast %17 : vector<16xf32> to vector<16x1xf32>
    %19 = tpu.reciprocal %18 {approx = true} : vector<16x1xf32> -> vector<16x1xf32>
    %20 = arith.mulf %18, %19 : vector<16x1xf32>
    %cst_12 = arith.constant 2.000000e+00 : f32
    %21 = vector.broadcast %cst_12 : f32 to vector<16x1xf32>
    %22 = arith.subf %21, %20 : vector<16x1xf32>
    %23 = arith.mulf %19, %22 : vector<16x1xf32>
    %24 = vector.broadcast %23 : vector<16x1xf32> to vector<16x4xf32>
    %25 = arith.mulf %16, %24 : vector<16x4xf32>
    %c0_13 = arith.constant 0 : index
    %c0_14 = arith.constant 0 : index
    %26 = vector.load %arg6[%c0_13, %c0_14] : memref<16x4xf32, #tpu.memory_space<vmem>>, vector<16x4xf32>
    tpu.vector_store %arg6[%c0_13, %c0_14], %25 {strides = array<i32>} : memref<16x4xf32, #tpu.memory_space<vmem>>, vector<16x4xf32>,
    return
  }
  func.func @transform_0(%arg0: i32) -> (i32, i32) {
    %c0_i32 = arith.constant 0 : i32
    %c0_i32_0 = arith.constant 0 : i32
    return %arg0, %c0_i32 : i32, i32
  }
  func.func @transform_1(%arg0: i32) -> (i32, i32) {
    %c0_i32 = arith.constant 0 : i32
    %c0_i32_0 = arith.constant 0 : i32
    %c0_i32_1 = arith.constant 0 : i32
    return %c0_i32, %c0_i32_0 : i32, i32
  }
  func.func @transform_2(%arg0: i32) -> (i32, i32) {
    %c0_i32 = arith.constant 0 : i32
    %c0_i32_0 = arith.constant 0 : i32
    %c0_i32_1 = arith.constant 0 : i32
    return %c0_i32, %c0_i32_0 : i32, i32
  }
  func.func @transform_3(%arg0: i32) -> (i32, i32) {
    %c0_i32 = arith.constant 0 : i32
    %c0_i32_0 = arith.constant 0 : i32
    %c0_i32_1 = arith.constant 0 : i32
    return %c0_i32, %c0_i32_0 : i32, i32
  }
  func.func @transform_4(%arg0: i32) -> (i32, i32) {
    %c0_i32 = arith.constant 0 : i32
    %c0_i32_0 = arith.constant 0 : i32
    %c0_i32_1 = arith.constant 0 : i32
    return %c0_i32, %c0_i32_0 : i32, i32
  }
  func.func @transform_5(%arg0: i32) -> (i32, i32) {
    %c0_i32 = arith.constant 0 : i32
    %c0_i32_0 = arith.constant 0 : i32
    return %arg0, %c0_i32 : i32, i32
  }
}

</mosaic_0001>

<llo_original>
// kernel: tpu_custom_call.1
$region0: #{tpu_custom_call.1}
  #allocation0 [shape = 'u32[]', space=smem, size = 0x4, offset = 0x4, fixed_abs, tag = 'smem constant byte address 0x4 - core index']
  #allocation1 [shape = 'u32[144,128]{1,0:T(1,128)}', space=vmem, size = 0x12000, scoped, tag = 'internal scratch']
  %s0 = inlined_call_operand.vmem [shape: f32[32,16], index: 0, kind: input, shape index: {}]
  %s1 = inlined_call_operand.vmem [shape: f32[16,32], index: 1, kind: input, shape index: {}]
  %s2 = inlined_call_operand.vmem [shape: f32[1,32], index: 2, kind: input, shape index: {}]
  %s3 = inlined_call_operand.vmem [shape: f32[32,4], index: 3, kind: input, shape index: {}]
  %s4 = inlined_call_operand.vmem [shape: f32[1,4], index: 4, kind: input, shape index: {}]
  %s5 = inlined_call_operand.vmem [shape: f32[32,4], index: 5, kind: output, shape index: {}]
  %s6 = sld [smem:[#allocation0]]
  $region53: #{tpu_custom_call.1} parent=0
    _
  %s8 = ssub.s32 1, %s6
  %s9 = scalar_select 0, %s8, %s6
  loop: start=0, step=1, limit=4
  $region2: #{tpu_custom_call.1} parent=0 // loop_pre_header
    _
  $region3: #{tpu_custom_call.1} parent=0 // loop_header
    %s11 = sphi 0, %s15
    %p12 = scmp.ge.s32.totalorder %s11, 4
    %s21 = sphi 0, %s23
    %s24 = sphi 0, %s21
    %s25 = sphi 0, %s24
    %s41 = sphi 0, %s25
    %s45 = sphi 0, %s45
    %s47 = sphi 0, %s45
    %s48 = sphi 0, %s47
    %s62 = sphi 0, %s48
    %s66 = sphi 0, %s66
    %s68 = sphi 0, %s66
    %s69 = sphi 0, %s68
    %s83 = sphi 0, %s69
    %s87 = sphi 0, %s87
    %s89 = sphi 0, %s87
    %s90 = sphi 0, %s89
    %s104 = sphi 0, %s90
    %s108 = sphi 0, %s108
    %s110 = sphi 0, %s108
    %s111 = sphi 0, %s110
    %s125 = sphi 0, %s111
    %s131 = sphi 0, %s133
    %s134 = sphi 0, %s131
    %s135 = sphi 0, %s134
    %s151 = sphi 0, %s135
  $region4: #{tpu_custom_call.1} parent=0 // loop_header_branch
    %14 = sbr.rel (%p12) target = $region8
  $region5: #{tpu_custom_call.1} parent=0 // loop_body
    %s16 = ssub.s32 %s11, 1
    %s17 = ssub.s32 %s11, 2
    %s18 = sadd.s32 %s11, 1
    %s19 = ssub.s32 %s11, %s18
    %p20 = scmp.eq.s32.totalorder %s19, 0
    %s22 = sadd.s32 %s21, 1
    %s23 = scalar_select %p20, %s21, %s22
    %p26 = pneg %p20
    %p27 = scmp.eq.s32.totalorder %s11, 1
    %p28 = por %p26, %p27
    %p29 = scmp.ne.s32.totalorder %s21, %s24
    %p30 = scmp.eq.s32.totalorder %s11, 0
    %p31 = por %p29, %p30
    %p32 = scmp.ne.s32.totalorder %s21, %s24
    %p33 = scmp.eq.s32.totalorder %s16, 1
    %p34 = por %p32, %p33
    %p35 = scmp.ne.s32.totalorder %s24, %s25
    %p36 = scmp.eq.s32.totalorder %s16, 0
    %p37 = por %p35, %p36
    %p38 = scmp.ne.s32.totalorder %s24, %s25
    %p39 = scmp.eq.s32.totalorder %s17, 1
    %p40 = por %p38, %p39
    %p42 = scmp.ne.s32.totalorder %s25, %s41
    %p43 = scmp.eq.s32.totalorder %s17, 0
    %p44 = por %p42, %p43
    %s46 = sadd.s32 %s45, 1
    %p49 = scmp.eq.s32.totalorder %s11, 1
    %p50 = scmp.ne.s32.totalorder %s45, %s47
    %p51 = scmp.eq.s32.totalorder %s11, 0
    %p52 = por %p50, %p51
    %p53 = scmp.ne.s32.totalorder %s45, %s47
    %p54 = scmp.eq.s32.totalorder %s16, 1
    %p55 = por %p53, %p54
    %p56 = scmp.ne.s32.totalorder %s47, %s48
    %p57 = scmp.eq.s32.totalorder %s16, 0
    %p58 = por %p56, %p57
    %p59 = scmp.ne.s32.totalorder %s47, %s48
    %p60 = scmp.eq.s32.totalorder %s17, 1
    %p61 = por %p59, %p60
    %p63 = scmp.ne.s32.totalorder %s48, %s62
    %p64 = scmp.eq.s32.totalorder %s17, 0
    %p65 = por %p63, %p64
    %s67 = sadd.s32 %s66, 1
    %p70 = scmp.eq.s32.totalorder %s11, 1
    %p71 = scmp.ne.s32.totalorder %s66, %s68
    %p72 = scmp.eq.s32.totalorder %s11, 0
    %p73 = por %p71, %p72
    %p74 = scmp.ne.s32.totalorder %s66, %s68
    %p75 = scmp.eq.s32.totalorder %s16, 1
    %p76 = por %p74, %p75
    %p77 = scmp.ne.s32.totalorder %s68, %s69
    %p78 = scmp.eq.s32.totalorder %s16, 0
    %p79 = por %p77, %p78
    %p80 = scmp.ne.s32.totalorder %s68, %s69
    %p81 = scmp.eq.s32.totalorder %s17, 1
    %p82 = por %p80, %p81
    %p84 = scmp.ne.s32.totalorder %s69, %s83
    %p85 = scmp.eq.s32.totalorder %s17, 0
    %p86 = por %p84, %p85
    %s88 = sadd.s32 %s87, 1
    %p91 = scmp.eq.s32.totalorder %s11, 1
    %p92 = scmp.ne.s32.totalorder %s87, %s89
    %p93 = scmp.eq.s32.totalorder %s11, 0
    %p94 = por %p92, %p93
    %p95 = scmp.ne.s32.totalorder %s87, %s89
    %p96 = scmp.eq.s32.totalorder %s16, 1
    %p97 = por %p95, %p96
    %p98 = scmp.ne.s32.totalorder %s89, %s90
    %p99 = scmp.eq.s32.totalorder %s16, 0
    %p100 = por %p98, %p99
    %p101 = scmp.ne.s32.totalorder %s89, %s90
    %p102 = scmp.eq.s32.totalorder %s17, 1
    %p103 = por %p101, %p102
    %p105 = scmp.ne.s32.totalorder %s90, %s104
    %p106 = scmp.eq.s32.totalorder %s17, 0
    %p107 = por %p105, %p106
    %s109 = sadd.s32 %s108, 1
    %p112 = scmp.eq.s32.totalorder %s11, 1
    %p113 = scmp.ne.s32.totalorder %s108, %s110
    %p114 = scmp.eq.s32.totalorder %s11, 0
    %p115 = por %p113, %p114
    %p116 = scmp.ne.s32.totalorder %s108, %s110
    %p117 = scmp.eq.s32.totalorder %s16, 1
    %p118 = por %p116, %p117
    %p119 = scmp.ne.s32.totalorder %s110, %s111
    %p120 = scmp.eq.s32.totalorder %s16, 0
    %p121 = por %p119, %p120
    %p122 = scmp.ne.s32.totalorder %s110, %s111
    %p123 = scmp.eq.s32.totalorder %s17, 1
    %p124 = por %p122, %p123
    %p126 = scmp.ne.s32.totalorder %s111, %s125
    %p127 = scmp.eq.s32.totalorder %s17, 0
    %p128 = por %p126, %p127
    %s129 = ssub.s32 %s11, %s18
    %p130 = scmp.eq.s32.totalorder %s129, 0
    %s132 = sadd.s32 %s131, 1
    %s133 = scalar_select %p130, %s131, %s132
    %p136 = pneg %p130
    %p137 = scmp.eq.s32.totalorder %s11, 1
    %p138 = por %p136, %p137
    %p139 = scmp.ne.s32.totalorder %s131, %s134
    %p140 = scmp.eq.s32.totalorder %s11, 0
    %p141 = por %p139, %p140
    %p142 = scmp.ne.s32.totalorder %s131, %s134
    %p143 = scmp.eq.s32.totalorder %s16, 1
    %p144 = por %p142, %p143
    %p145 = scmp.ne.s32.totalorder %s134, %s135
    %p146 = scmp.eq.s32.totalorder %s16, 0
    %p147 = por %p145, %p146
    %p148 = scmp.ne.s32.totalorder %s134, %s135
    %p149 = scmp.eq.s32.totalorder %s17, 1
    %p150 = por %p148, %p149
    %p152 = scmp.ne.s32.totalorder %s135, %s151
    %p153 = scmp.eq.s32.totalorder %s17, 0
    %p154 = por %p152, %p153
    %p155 = scmp.le.s32.totalorder 1, %s11
    %p156 = scmp.lt.s32.totalorder %s11, 3
    %p157 = pnand %p155, %p156
    %p158 = pneg %p157
    // Predicated region
    $region9: #{tpu_custom_call.1} parent=5 // pred_check
      _
    $region10: #{tpu_custom_call.1} parent=5 // pred_check_branch
      %160 = sbr.rel (%p157) target = $region12
    $region11: #{tpu_custom_call.1} parent=5 // pred_region
      %s161 = ssub.s32 %s11, 1
      // Predicated region
      $region13: #{tpu_custom_call.1} parent=11 // pred_check
        %p162 = pneg %p58
      $region14: #{tpu_custom_call.1} parent=11 // pred_check_branch
        %164 = sbr.rel (%p162) target = $region16
      $region15: #{tpu_custom_call.1} parent=11 // pred_region
        _
      $region16: #{tpu_custom_call.1} parent=11 // pred_fallthru
        _
      // Predicated region
      $region17: #{tpu_custom_call.1} parent=11 // pred_check
        %p165 = pneg %p79
      $region18: #{tpu_custom_call.1} parent=11 // pred_check_branch
        %167 = sbr.rel (%p165) target = $region20
      $region19: #{tpu_custom_call.1} parent=11 // pred_region
        _
      $region20: #{tpu_custom_call.1} parent=11 // pred_fallthru
        _
      // Predicated region
      $region21: #{tpu_custom_call.1} parent=11 // pred_check
        %p168 = pneg %p100
      $region22: #{tpu_custom_call.1} parent=11 // pred_check_branch
        %170 = sbr.rel (%p168) target = $region24
      $region23: #{tpu_custom_call.1} parent=11 // pred_region
        _
      $region24: #{tpu_custom_call.1} parent=11 // pred_fallthru
        _
      // Predicated region
      $region25: #{tpu_custom_call.1} parent=11 // pred_check
        %p171 = pneg %p121
      $region26: #{tpu_custom_call.1} parent=11 // pred_check_branch
        %173 = sbr.rel (%p171) target = $region28
      $region27: #{tpu_custom_call.1} parent=11 // pred_region
        _
      $region28: #{tpu_custom_call.1} parent=11 // pred_fallthru
        _
    $region12: #{tpu_custom_call.1} parent=5 // pred_fallthru
      _
    %p174 = scmp.lt.s32.totalorder %s11, 2
    // Predicated region
    $region29: #{tpu_custom_call.1} parent=5 // pred_check
      %p175 = pneg %p174
    $region30: #{tpu_custom_call.1} parent=5 // pred_check_branch
      %177 = sbr.rel (%p175) target = $region32
    $region31: #{tpu_custom_call.1} parent=5 // pred_region
      // Predicated region
      $region33: #{tpu_custom_call.1} parent=31 // pred_check
        %p178 = pneg %p31
      $region34: #{tpu_custom_call.1} parent=31 // pred_check_branch
        %180 = sbr.rel (%p178) target = $region36
      $region35: #{tpu_custom_call.1} parent=31 // pred_region
        %s181 = smul.u32 2, %s11
        %p182 = scmp.lt.s32.totalorder %s181, 3
        %s183 = scalar_select %p182, %s181, 3
        %s184 = smul.addr %s183, 8
        %s185 = scalar_lea.vmem %s0, %s184
        %s186 = smul.u32 2, %s11
      $region36: #{tpu_custom_call.1} parent=31 // pred_fallthru
        _
    $region32: #{tpu_custom_call.1} parent=5 // pred_fallthru
      _
    %p187 = scmp.le.s32.totalorder 1, %s11
    %p188 = scmp.lt.s32.totalorder %s11, 3
    %p189 = pnand %p187, %p188
    %p190 = pneg %p189
    // Predicated region
    $region37: #{tpu_custom_call.1} parent=5 // pred_check
      _
    $region38: #{tpu_custom_call.1} parent=5 // pred_check_branch
      %192 = sbr.rel (%p189) target = $region40
    $region39: #{tpu_custom_call.1} parent=5 // pred_region
      %s193 = ssub.s32 %s11, 1
      %s194 = smul.u32 2, %s16
      %p195 = scmp.lt.s32.totalorder %s194, 3
      %s196 = scalar_select %p195, %s194, 3
      %s197 = smul.addr %s196, 8
      %s198 = scalar_lea.vmem %s0, %s197
      %p199 = pneg %p37
      %p200 = pneg %p34
      %p201 = pneg %p58
      %p202 = pneg %p55
      %p203 = pneg %p79
      %p204 = pneg %p76
      %p205 = pneg %p100
      %p206 = pneg %p97
      %p207 = pneg %p121
      %p208 = pneg %p118
      %p209 = pneg %p147
      %p210 = pneg %p144
      %s211 = smul.u32 2, %s16
      %p212 = scmp.lt.s32.totalorder %s211, 3
      %s213 = scalar_select %p212, %s211, 3
      %s214 = smul.addr %s213, 8
      %s215 = scalar_lea.vmem %s5, %s214
      %s216 = smul.u32 2, %s16
      %p217 = scmp.lt.s32.totalorder %s216, 3
      %s218 = scalar_select %p217, %s216, 3
      %s219 = smul.addr %s218, 8
      %s220 = scalar_lea.vmem %s0, %s219
      %s221 = smul.u32 2, %s16
      %s222 = smul.u32 2, %s16
      %p223 = scmp.lt.s32.totalorder %s222, 3
      %s224 = scalar_select %p223, %s222, 3
      %s225 = smul.addr %s224, 8
      %s226 = scalar_lea.vmem %s5, %s225
      %s227 = smul.u32 2, %s16
      %v228 = vld [vmem:[%s220] sm:$0xff]
      %v229 = vld [vmem:[%s220 + $0x8] sm:$0xff]
      %v230 = vld [vmem:[%s1] sm:$0xff]
      %v231 = vld [vmem:[%s1 + $0x8] sm:$0xff]
      %v232 = vld [vmem:[%s2] sm:$0x1]
      %v234 = vlaneseq
      %v235 = vshrl.u32 %v234, 7
      %v236 = vsub.s32 0, %v235
      %v237 = vrot.slane %v232, %v236
      %vm239 = vcmask 130048
      %v241 = vsel %vm239, %v228, 0
      %v244 = vsel %vm239, %v229, 0
      %246 = vmatprep.subr.mxu0 0.0
      %247 = vmatpush1.msra.mxu0 0.0
      %248 = vmatprep.subr.mxu0 0.0
      %249 = vmatpush1.msra.mxu0 0.0
      %250 = vmatprep.subr.mxu0 0.0
      %251 = vmatpush1.msra.mxu0 0.0
      %252 = vmatprep.subr.mxu0 0.0
      %253 = vmatpush1.msra.mxu0 0.0
      %254 = vmatprep.subr.mxu0 0.0
      %255 = vmatpush1.msra.mxu0 0.0
      %256 = vmatprep.subr.mxu0 0.0
      %257 = vmatpush1.msra.mxu0 0.0
      %258 = vmatprep.subr.mxu0 0.0
      %259 = vmatpush1.msra.mxu0 0.0
      %260 = vmatprep.subr.mxu0 0.0
      %261 = vmatpush1.msra.mxu0 0.0
      %262 = vmatprep.subr.mxu0 0.0
      %263 = vmatpush1.msra.mxu0 0.0
      %264 = vmatprep.subr.mxu0 0.0
      %265 = vmatpush1.msra.mxu0 0.0
      %266 = vmatprep.subr.mxu0 0.0
      %267 = vmatpush1.msra.mxu0 0.0
      %268 = vmatprep.subr.mxu0 0.0
      %269 = vmatpush1.msra.mxu0 0.0
      %270 = vmatprep.subr.mxu0 0.0
      %271 = vmatpush1.msra.mxu0 0.0
      %272 = vmatprep.subr.mxu0 0.0
      %273 = vmatpush1.msra.mxu0 0.0
      %274 = vmatprep.subr.mxu0 0.0
      %275 = vmatpush1.msra.mxu0 %v231
      %276 = vmatprep.subr.mxu0 0.0
      %277 = vmatpush1.msra.mxu0 %v230
      %278 = vmatprep.subr.mxu0 0.0
      %279 = vmatpush2.msra.mxu0 0.0
      %280 = vmatprep.subr.mxu0 0.0
      %281 = vmatpush2.msra.mxu0 0.0
      %282 = vmatprep.subr.mxu0 0.0
      %283 = vmatpush2.msra.mxu0 0.0
      %284 = vmatprep.subr.mxu0 0.0
      %285 = vmatpush2.msra.mxu0 0.0
      %286 = vmatprep.subr.mxu0 0.0
      %287 = vmatpush2.msra.mxu0 0.0
      %288 = vmatprep.subr.mxu0 0.0
      %289 = vmatpush2.msra.mxu0 0.0
      %290 = vmatprep.subr.mxu0 0.0
      %291 = vmatpush2.msra.mxu0 0.0
      %292 = vmatprep.subr.mxu0 0.0
      %293 = vmatpush2.msra.mxu0 0.0
      %294 = vmatprep.subr.mxu0 0.0
      %295 = vmatpush2.msra.mxu0 0.0
      %296 = vmatprep.subr.mxu0 0.0
      %297 = vmatpush2.msra.mxu0 0.0
      %298 = vmatprep.subr.mxu0 0.0
      %299 = vmatpush2.msra.mxu0 0.0
      %300 = vmatprep.subr.mxu0 0.0
      %301 = vmatpush2.msra.mxu0 0.0
      %302 = vmatprep.subr.mxu0 0.0
      %303 = vmatpush2.msra.mxu0 0.0
      %304 = vmatprep.subr.mxu0 0.0
      %305 = vmatpush2.msra.mxu0 0.0
      %306 = vmatprep.subr.mxu0 0.0
      %307 = vmatpush2.msra.mxu0 0.0
      %308 = vmatprep.subr.mxu0 0.0
      %309 = vmatpush2.msra.mxu0 0.0
      %310 = vmatprep.mubr.f32.mxu0 0.0
      %311 = vmatmul.mubr.f32.gmra.mxu0 %v241
      %v312 = vpop.f32.mrf.mxu0
      %v313 = vadd.f32 %v237, %v312
      %v314 = vpop.f32.mrf.mxu0
      %315 = vmatprep.mubr.f32.mxu0 0.0
      %316 = vmatmul.mubr.f32.gmra.mxu0 %v244
      %v317 = vpop.f32.mrf.mxu0
      %v318 = vadd.f32 %v237, %v317
      %v319 = vpop.f32.mrf.mxu0
      %320 = vdwg.mxu0
      %v321 = vtanh.pop %v313
      %v322 = vtanh.pop %v318
      %v323 = vld [vmem:[%s3] sm:$0xff]
      %v324 = vld [vmem:[%s3 + $0x8] sm:$0xff]
      %v325 = vld [vmem:[%s3 + $0x10] sm:$0xff]
      %v326 = vld [vmem:[%s3 + $0x18] sm:$0xff]
      %v327 = vld [vmem:[%s4] sm:$0x1]
      %v329 = vlaneseq
      %v330 = vshrl.u32 %v329, 7
      %v331 = vsub.s32 0, %v330
      %v332 = vrot.slane %v327, %v331
      %vm334 = vcmask 261120
      %v336 = vsel %vm334, %v321, 0
      %v339 = vsel %vm334, %v322, 0
      %341 = vmatprep.subr.mxu0 0.0
      %342 = vmatpush1.msra.mxu0 0.0
      %343 = vmatprep.subr.mxu0 0.0
      %344 = vmatpush1.msra.mxu0 0.0
      %345 = vmatprep.subr.mxu0 0.0
      %346 = vmatpush1.msra.mxu0 0.0
      %347 = vmatprep.subr.mxu0 0.0
      %348 = vmatpush1.msra.mxu0 0.0
      %349 = vmatprep.subr.mxu0 0.0
      %350 = vmatpush1.msra.mxu0 0.0
      %351 = vmatprep.subr.mxu0 0.0
      %352 = vmatpush1.msra.mxu0 0.0
      %353 = vmatprep.subr.mxu0 0.0
      %354 = vmatpush1.msra.mxu0 0.0
      %355 = vmatprep.subr.mxu0 0.0
      %356 = vmatpush1.msra.mxu0 0.0
      %357 = vmatprep.subr.mxu0 0.0
      %358 = vmatpush1.msra.mxu0 0.0
      %359 = vmatprep.subr.mxu0 0.0
      %360 = vmatpush1.msra.mxu0 0.0
      %361 = vmatprep.subr.mxu0 0.0
      %362 = vmatpush1.msra.mxu0 0.0
      %363 = vmatprep.subr.mxu0 0.0
      %364 = vmatpush1.msra.mxu0 0.0
      %365 = vmatprep.subr.mxu0 0.0
      %366 = vmatpush1.msra.mxu0 %v326
      %367 = vmatprep.subr.mxu0 0.0
      %368 = vmatpush1.msra.mxu0 %v325
      %369 = vmatprep.subr.mxu0 0.0
      %370 = vmatpush1.msra.mxu0 %v324
      %371 = vmatprep.subr.mxu0 0.0
      %372 = vmatpush1.msra.mxu0 %v323
      %373 = vmatprep.subr.mxu0 0.0
      %374 = vmatpush2.msra.mxu0 0.0
      %375 = vmatprep.subr.mxu0 0.0
      %376 = vmatpush2.msra.mxu0 0.0
      %377 = vmatprep.subr.mxu0 0.0
      %378 = vmatpush2.msra.mxu0 0.0
      %379 = vmatprep.subr.mxu0 0.0
      %380 = vmatpush2.msra.mxu0 0.0
      %381 = vmatprep.subr.mxu0 0.0
      %382 = vmatpush2.msra.mxu0 0.0
      %383 = vmatprep.subr.mxu0 0.0
      %384 = vmatpush2.msra.mxu0 0.0
      %385 = vmatprep.subr.mxu0 0.0
      %386 = vmatpush2.msra.mxu0 0.0
      %387 = vmatprep.subr.mxu0 0.0
      %388 = vmatpush2.msra.mxu0 0.0
      %389 = vmatprep.subr.mxu0 0.0
      %390 = vmatpush2.msra.mxu0 0.0
      %391 = vmatprep.subr.mxu0 0.0
      %392 = vmatpush2.msra.mxu0 0.0
      %393 = vmatprep.subr.mxu0 0.0
      %394 = vmatpush2.msra.mxu0 0.0
      %395 = vmatprep.subr.mxu0 0.0
      %396 = vmatpush2.msra.mxu0 0.0
      %397 = vmatprep.subr.mxu0 0.0
      %398 = vmatpush2.msra.mxu0 0.0
      %399 = vmatprep.subr.mxu0 0.0
      %400 = vmatpush2.msra.mxu0 0.0
      %401 = vmatprep.subr.mxu0 0.0
      %402 = vmatpush2.msra.mxu0 0.0
      %403 = vmatprep.subr.mxu0 0.0
      %404 = vmatpush2.msra.mxu0 0.0
      %405 = vmatprep.mubr.f32.mxu0 0.0
      %406 = vmatmul.mubr.f32.gmra.mxu0 %v336
      %v407 = vpop.f32.mrf.mxu0
      %v408 = vadd.f32 %v332, %v407
      %v409 = vpop.f32.mrf.mxu0
      %410 = vmatprep.mubr.f32.mxu0 0.0
      %411 = vmatmul.mubr.f32.gmra.mxu0 %v339
      %v412 = vpop.f32.mrf.mxu0
      %v413 = vadd.f32 %v332, %v412
      %v414 = vpop.f32.mrf.mxu0
      %415 = vdwg.mxu0
      %vm416 = vcmask 31744
      %v417 = vsel %vm416, %v408, -inf
      %418 = vmax.xlane.f32.xlu0 %v417
      %v419 = vpop.xlane.xlu0 %418
      %v420 = vsel %vm416, %v413, -inf
      %421 = vmax.xlane.f32.xlu0 %v420
      %v422 = vpop.xlane.xlu0 %421
      %v423 = vsub.f32 %v408, %v419
      %v424 = vsub.f32 %v413, %v422
      %v425 = vmul.f32 %v423, 1.442695
      %v426 = vpow.pop %v425
      %v427 = vmul.f32 %v424, 1.442695
      %v428 = vpow.pop %v427
      %v429 = vsel %vm416, %v426, 0.0
      %430 = vadd.xlane.f32.xlu0 %v429
      %v431 = vpop.xlane.xlu0 %430
      %v432 = vsel %vm416, %v428, 0.0
      %433 = vadd.xlane.f32.xlu0 %v432
      %v434 = vpop.xlane.xlu0 %433
      %v435 = vrcp.pop %v431
      %v436 = vrcp.pop %v434
      %v437 = vmul.f32 %v431, %v435
      %v438 = vmul.f32 %v434, %v436
      %v439 = vsub.f32 2.0, %v437
      %v440 = vsub.f32 2.0, %v438
      %v441 = vmul.f32 %v435, %v439
      %v442 = vmul.f32 %v436, %v440
      %v443 = vmul.f32 %v426, %v441
      %v444 = vmul.f32 %v428, %v442
      %445 = vst.msk [vmem:[%s226] sm:$0xff] %vm416, %v443
      %446 = vst.msk [vmem:[%s226 + $0x8] sm:$0xff] %vm416, %v444
      %s447 = smul.u32 2, %s16
      %p448 = scmp.lt.s32.totalorder %s447, 3
      %s449 = scalar_select %p448, %s447, 3
      %s450 = smul.addr %s449, 8
      %s451 = scalar_lea.vmem %s5, %s450
      // Predicated region
      $region41: #{tpu_custom_call.1} parent=39 // pred_check
        %p452 = pneg %p144
      $region42: #{tpu_custom_call.1} parent=39 // pred_check_branch
        %454 = sbr.rel (%p452) target = $region44
      $region43: #{tpu_custom_call.1} parent=39 // pred_region
        %s455 = smul.u32 2, %s16
      $region44: #{tpu_custom_call.1} parent=39 // pred_fallthru
        _
    $region40: #{tpu_custom_call.1} parent=5 // pred_fallthru
      _
    %p456 = scmp.le.s32.totalorder 2, %s11
    // Predicated region
    $region45: #{tpu_custom_call.1} parent=5 // pred_check
      %p457 = pneg %p456
    $region46: #{tpu_custom_call.1} parent=5 // pred_check_branch
      %459 = sbr.rel (%p457) target = $region48
    $region47: #{tpu_custom_call.1} parent=5 // pred_region
      %s460 = ssub.s32 %s11, 2
      // Predicated region
      $region49: #{tpu_custom_call.1} parent=47 // pred_check
        %p461 = pneg %p150
      $region50: #{tpu_custom_call.1} parent=47 // pred_check_branch
        %463 = sbr.rel (%p461) target = $region52
      $region51: #{tpu_custom_call.1} parent=47 // pred_region
        %s464 = smul.u32 2, %s17
        %p465 = scmp.lt.s32.totalorder %s464, 3
        %s466 = scalar_select %p465, %s464, 3
        %s467 = smul.addr %s466, 8
        %s468 = scalar_lea.vmem %s5, %s467
      $region52: #{tpu_custom_call.1} parent=47 // pred_fallthru
        _
    $region48: #{tpu_custom_call.1} parent=5 // pred_fallthru
      _
  $region6: #{tpu_custom_call.1} parent=0 // loop_footer
    %s15 = sadd.s32 1, %s11
  $region7: #{tpu_custom_call.1} parent=0 // loop_footer_branch
    %10 = sbr.rel target = $region3
  $region8: #{tpu_custom_call.1} parent=0 // loop_exit
    _

</llo_original>
